<compile_context>
chip_gen: v6e
topology: v6e:2x2x1
jax: 0.10.0
libtpu: 0.0.40
codegen_flags: <defaults>
</compile_context>

<pallas_src>
import functools

import jax
import jax.numpy as jnp
from jax.experimental import pallas as pl
from jax.experimental.pallas import tpu as pltpu


def _round_up(n, m):
    return ((n + m - 1) // m) * m


def sac_actor_kernel(x_ref, w1_ref, b1_ref, w2_ref, b2_ref, w3_ref, b3_ref,
                     mean_ref):
    # Layer 1: Linear + ReLU (MXU matmul, f32 accumulate; K lane-padded to 128).
    h1 = jnp.dot(x_ref[...], w1_ref[...], preferred_element_type=jnp.float32)
    h1 = jnp.maximum(h1 + b1_ref[...], 0.0)
    # Layer 2: Linear + ReLU.
    h2 = jnp.dot(h1.astype(w2_ref.dtype), w2_ref[...],
                 preferred_element_type=jnp.float32)
    h2 = jnp.maximum(h2 + b2_ref[...], 0.0)
    # Layer 3: Linear -> mean (N lane-padded to 128 -> unmasked full-width store).
    mean_ref[...] = (
        jnp.dot(h2.astype(w3_ref.dtype), w3_ref[...],
                preferred_element_type=jnp.float32)
        + b3_ref[...]).astype(mean_ref.dtype)


@functools.partial(jax.jit, static_argnames=("block_b", "use_bf16"))
def sac_actor_forward(x, params, *, block_b=512, use_bf16=False):
    """x: (B, obs_dim) f32. Returns (mean (B, act_dim), std (act_dim,))."""
    w1, b1, w2, b2, w3, b3, log_std = params
    B, obs_dim = x.shape
    hidden = w1.shape[1]
    act_dim = w3.shape[1]

    # --- layout padding: lane-dense matmuls and stores ---
    k_pad = _round_up(obs_dim, 128)        # layer-1 contraction dim
    n_pad = _round_up(act_dim, 128)        # mean lane dim
    tb = min(block_b, _round_up(B, 8))     # batch tile (sublane-aligned)
    b_pad = _round_up(B, tb)

    compute_dtype = jnp.bfloat16 if use_bf16 else jnp.float32

    xp = jnp.zeros((b_pad, k_pad), compute_dtype).at[:B, :obs_dim].set(
        x.astype(compute_dtype))
    w1p = jnp.zeros((k_pad, hidden), compute_dtype).at[:obs_dim, :].set(
        w1.astype(compute_dtype))
    w2c = w2.astype(compute_dtype)
    w3p = jnp.zeros((hidden, n_pad), compute_dtype).at[:, :act_dim].set(
        w3.astype(compute_dtype))
    b3p = jnp.zeros((1, n_pad), jnp.float32).at[:, :act_dim].set(b3)

    grid = (b_pad // tb,)
    # Weights/biases: same block every grid step -> stay resident in VMEM.
    resident = lambda shape: pl.BlockSpec(shape, lambda i: (0,) * len(shape))

    mean_padded = pl.pallas_call(
        sac_actor_kernel,
        out_shape=jax.ShapeDtypeStruct((b_pad, n_pad), jnp.float32),
        grid=grid,
        in_specs=[
            pl.BlockSpec((tb, k_pad), lambda i: (i, 0)),   # x batch tile
            resident((k_pad, hidden)),                     # w1
            resident((1, hidden)),                         # b1
            resident((hidden, hidden)),                    # w2
            resident((1, hidden)),                         # b2
            resident((hidden, n_pad)),                     # w3 (lane-padded)
            resident((1, n_pad)),                          # b3 (lane-padded)
        ],
        out_specs=pl.BlockSpec((tb, n_pad), lambda i: (i, 0)),
        compiler_params=pltpu.CompilerParams(
            dimension_semantics=("parallel",)),
    )(xp, w1p, b1, w2c, b2, w3p, b3p)

    mean = mean_padded[:B, :act_dim]
    # std depends only on a parameter -> compute once outside the gridded kernel.
    std = jnp.exp(log_std)
    return mean, std


def init_params(key, obs_dim, act_dim, hidden=256):
    """Deterministic synthetic init (PyTorch-Linear-like uniform bounds)."""
    ks = jax.random.split(key, 6)

    def lin(kw, kb, fan_in, fan_out):
        bound = 1.0 / jnp.sqrt(fan_in)
        # stored as (in, out) == transpose of PyTorch's (out, in)
        w = jax.random.uniform(kw, (fan_in, fan_out), jnp.float32, -bound, bound)
        b = jax.random.uniform(kb, (1, fan_out), jnp.float32, -bound, bound)
        return w, b

    w1, b1 = lin(ks[0], ks[1], obs_dim, hidden)
    w2, b2 = lin(ks[2], ks[3], hidden, hidden)
    w3, b3 = lin(ks[4], ks[5], hidden, act_dim)
    log_std = jnp.zeros((act_dim,), jnp.float32)  # nn.Parameter(torch.zeros(act_dim))
    return (w1, b1, w2, b2, w3, b3, log_std)


def reference_forward(x, params):
    w1, b1, w2, b2, w3, b3, log_std = params
    h1 = jnp.maximum(x @ w1 + b1, 0.0)
    h2 = jnp.maximum(h1 @ w2 + b2, 0.0)
    mean = h2 @ w3 + b3
    std = jnp.exp(log_std)
    return mean, std


if __name__ == "__main__":
    key = jax.random.PRNGKey(0)
    k_x, k_p, k_x2 = jax.random.split(key, 3)

    B, obs_dim, act_dim = 8, 17, 6
    x = jax.random.normal(k_x, (B, obs_dim), jnp.float32)
    params = init_params(k_p, obs_dim, act_dim)

    mean, std = sac_actor_forward(x, params)
    jax.block_until_ready((mean, std))

    mean_ref, std_ref = reference_forward(x, params)
    assert mean.shape == (B, act_dim) and std.shape == (act_dim,)
    assert jnp.allclose(mean, mean_ref, atol=1e-4, rtol=1e-4)
    assert jnp.allclose(std, std_ref, atol=1e-6, rtol=1e-6)

    # Exercise the batch grid (padding + multi-step pipeline, grid=(2,)).
    B2 = 1000
    x2 = jax.random.normal(k_x2, (B2, obs_dim), jnp.float32)
    mean2, std2 = sac_actor_forward(x2, params)
    jax.block_until_ready((mean2, std2))
    mean2_ref, _ = reference_forward(x2, params)
    assert mean2.shape == (B2, act_dim)
    assert jnp.allclose(mean2, mean2_ref, atol=1e-4, rtol=1e-4)

    print("KERNEL_OK")
</pallas_src>

<mosaic_0001>
module attributes {stable_mosaic.version = 11 : i64} {
  func.func @sac_actor_kernel(%arg0: i32, %arg1: memref<8x128xf32, #tpu.memory_space<vmem>>, %arg2: memref<128x256xf32, #tpu.memory_space<vmem>>, %arg3: memref<1x256xf32, #tpu.memory_space<vmem>>, %arg4: memref<256x256xf32, #tpu.memory_space<vmem>>, %arg5: memref<1x256xf32, #tpu.memory_space<vmem>>, %arg6: memref<256x128xf32, #tpu.memory_space<vmem>>, %arg7: memref<1x128xf32, #tpu.memory_space<vmem>>, %arg8: memref<8x128xf32, #tpu.memory_space<vmem>>) attributes {dimension_semantics = [#tpu.dimension_semantics<parallel>], iteration_bounds = array<i64: 1>, scalar_prefetch = 0 : i64, scratch_operands = 0 : i64, tpu.core_type = #tpu.core_type<tc>, window_params = [{transform_indices = @transform_0, window_bounds = array<i64: 8, 128>}, {pipeline_mode = #tpu.pipeline_mode<synchronous>, transform_indices = @transform_1, window_bounds = array<i64: 128, 256>}, {pipeline_mode = #tpu.pipeline_mode<synchronous>, transform_indices = @transform_2, window_bounds = array<i64: 1, 256>}, {pipeline_mode = #tpu.pipeline_mode<synchronous>, transform_indices = @transform_3, window_bounds = array<i64: 256, 256>}, {pipeline_mode = #tpu.pipeline_mode<synchronous>, transform_indices = @transform_4, window_bounds = array<i64: 1, 256>}, {pipeline_mode = #tpu.pipeline_mode<synchronous>, transform_indices = @transform_5, window_bounds = array<i64: 256, 128>}, {pipeline_mode = #tpu.pipeline_mode<synchronous>, transform_indices = @transform_6, window_bounds = array<i64: 1, 128>}, {transform_indices = @transform_7, window_bounds = array<i64: 8, 128>}]} {
    %c0 = arith.constant 0 : index
    %c0_0 = arith.constant 0 : index
    %0 = vector.load %arg1[%c0, %c0_0] : memref<8x128xf32, #tpu.memory_space<vmem>>, vector<8x128xf32>
    %c0_1 = arith.constant 0 : index
    %c0_2 = arith.constant 0 : index
    %1 = vector.load %arg2[%c0_1, %c0_2] : memref<128x256xf32, #tpu.memory_space<vmem>>, vector<128x256xf32>
    %cst = arith.constant dense<0.000000e+00> : vector<8x256xf32>
    %2 = tpu.matmul %0, %1, %cst {dimension_numbers = #tpu.dot_dimension_numbers<[1], [0], [0], [1], [0, 0, 1, 1], [], []>} : vector<8x128xf32>, vector<128x256xf32>, vector<8x256xf32> -> vector<8x256xf32>
    %c0_3 = arith.constant 0 : index
    %c0_4 = arith.constant 0 : index
    %3 = vector.load %arg3[%c0_3, %c0_4] : memref<1x256xf32, #tpu.memory_space<vmem>>, vector<1x256xf32>
    %4 = vector.broadcast %3 : vector<1x256xf32> to vector<8x256xf32>
    %5 = arith.addf %2, %4 : vector<8x256xf32>
    %cst_5 = arith.constant 0.000000e+00 : f32
    %6 = vector.broadcast %cst_5 : f32 to vector<8x256xf32>
    %7 = arith.maximumf %5, %6 : vector<8x256xf32>
    %c0_6 = arith.constant 0 : index
    %c0_7 = arith.constant 0 : index
    %8 = vector.load %arg4[%c0_6, %c0_7] : memref<256x256xf32, #tpu.memory_space<vmem>>, vector<256x256xf32>
    %cst_8 = arith.constant dense<0.000000e+00> : vector<8x256xf32>
    %9 = tpu.matmul %7, %8, %cst_8 {dimension_numbers = #tpu.dot_dimension_numbers<[1], [0], [0], [1], [0, 0, 1, 1], [], []>} : vector<8x256xf32>, vector<256x256xf32>, vector<8x256xf32> -> vector<8x256xf32>
    %c0_9 = arith.constant 0 : index
    %c0_10 = arith.constant 0 : index
    %10 = vector.load %arg5[%c0_9, %c0_10] : memref<1x256xf32, #tpu.memory_space<vmem>>, vector<1x256xf32>
    %11 = vector.broadcast %10 : vector<1x256xf32> to vector<8x256xf32>
    %12 = arith.addf %9, %11 : vector<8x256xf32>
    %cst_11 = arith.constant 0.000000e+00 : f32
    %13 = vector.broadcast %cst_11 : f32 to vector<8x256xf32>
    %14 = arith.maximumf %12, %13 : vector<8x256xf32>
    %c0_12 = arith.constant 0 : index
    %c0_13 = arith.constant 0 : index
    %15 = vector.load %arg6[%c0_12, %c0_13] : memref<256x128xf32, #tpu.memory_space<vmem>>, vector<256x128xf32>
    %cst_14 = arith.constant dense<0.000000e+00> : vector<8x128xf32>
    %16 = tpu.matmul %14, %15, %cst_14 {dimension_numbers = #tpu.dot_dimension_numbers<[1], [0], [0], [1], [0, 0, 1, 1], [], []>} : vector<8x256xf32>, vector<256x128xf32>, vector<8x128xf32> -> vector<8x128xf32>
    %c0_15 = arith.constant 0 : index
    %c0_16 = arith.constant 0 : index
    %17 = vector.load %arg7[%c0_15, %c0_16] : memref<1x128xf32, #tpu.memory_space<vmem>>, vector<1x128xf32>
    %18 = vector.broadcast %17 : vector<1x128xf32> to vector<8x128xf32>
    %19 = arith.addf %16, %18 : vector<8x128xf32>
    %c0_17 = arith.constant 0 : index
    %c0_18 = arith.constant 0 : index
    %20 = vector.load %arg8[%c0_17, %c0_18] : memref<8x128xf32, #tpu.memory_space<vmem>>, vector<8x128xf32>
    tpu.vector_store %arg8[%c0_17, %c0_18], %19 {strides = array<i32>} : memref<8x128xf32, #tpu.memory_space<vmem>>, vector<8x128xf32>,
    return
  }
  func.func @transform_0(%arg0: i32) -> (i32, i32) {
    %c0_i32 = arith.constant 0 : i32
    %c0_i32_0 = arith.constant 0 : i32
    return %arg0, %c0_i32 : i32, i32
  }
  func.func @transform_1(%arg0: i32) -> (i32, i32) {
    %c0_i32 = arith.constant 0 : i32
    %c0_i32_0 = arith.constant 0 : i32
    %c0_i32_1 = arith.constant 0 : i32
    return %c0_i32, %c0_i32_0 : i32, i32
  }
  func.func @transform_2(%arg0: i32) -> (i32, i32) {
    %c0_i32 = arith.constant 0 : i32
    %c0_i32_0 = arith.constant 0 : i32
    %c0_i32_1 = arith.constant 0 : i32
    return %c0_i32, %c0_i32_0 : i32, i32
  }
  func.func @transform_3(%arg0: i32) -> (i32, i32) {
    %c0_i32 = arith.constant 0 : i32
    %c0_i32_0 = arith.constant 0 : i32
    %c0_i32_1 = arith.constant 0 : i32
    return %c0_i32, %c0_i32_0 : i32, i32
  }
  func.func @transform_4(%arg0: i32) -> (i32, i32) {
    %c0_i32 = arith.constant 0 : i32
    %c0_i32_0 = arith.constant 0 : i32
    %c0_i32_1 = arith.constant 0 : i32
    return %c0_i32, %c0_i32_0 : i32, i32
  }
  func.func @transform_5(%arg0: i32) -> (i32, i32) {
    %c0_i32 = arith.constant 0 : i32
    %c0_i32_0 = arith.constant 0 : i32
    %c0_i32_1 = arith.constant 0 : i32
    return %c0_i32, %c0_i32_0 : i32, i32
  }
  func.func @transform_6(%arg0: i32) -> (i32, i32) {
    %c0_i32 = arith.constant 0 : i32
    %c0_i32_0 = arith.constant 0 : i32
    %c0_i32_1 = arith.constant 0 : i32
    return %c0_i32, %c0_i32_0 : i32, i32
  }
  func.func @transform_7(%arg0: i32) -> (i32, i32) {
    %c0_i32 = arith.constant 0 : i32
    %c0_i32_0 = arith.constant 0 : i32
    return %arg0, %c0_i32 : i32, i32
  }
}

</mosaic_0001>

<llo_original>
// kernel: sac_actor_forward.1
$region0: #{sac_actor_forward.1}
  #allocation0 [shape = 'u32[]', space=smem, size = 0x4, offset = 0x4, fixed_abs, tag = 'smem constant byte address 0x4 - core index']
  #allocation1 [shape = 'u32[144,128]{1,0:T(1,128)}', space=vmem, size = 0x12000, scoped, tag = 'internal scratch']
  %s0 = inlined_call_operand.vmem [shape: f32[8,128], index: 0, kind: input, shape index: {}]
  %s1 = inlined_call_operand.vmem [shape: f32[128,256], index: 1, kind: input, shape index: {}]
  %s2 = inlined_call_operand.vmem [shape: f32[1,256], index: 2, kind: input, shape index: {}]
  %s3 = inlined_call_operand.vmem [shape: f32[256,256], index: 3, kind: input, shape index: {}]
  %s4 = inlined_call_operand.vmem [shape: f32[1,256], index: 4, kind: input, shape index: {}]
  %s5 = inlined_call_operand.vmem [shape: f32[256,128], index: 5, kind: input, shape index: {}]
  %s6 = inlined_call_operand.vmem [shape: f32[1,128], index: 6, kind: input, shape index: {}]
  %s7 = inlined_call_operand.hbm [shape: f32[8,128], index: 7, kind: output, shape index: {}]
  %s8 = sld [smem:[#allocation0]]
  $region38: #{sac_actor_forward.1} parent=0
    _
  %s10 = ssub.s32 1, %s8
  %s11 = scalar_select 0, %s10, %s8
  $region1: #{sac_actor_forward.1} parent=0
    #allocation2 [shape = 'u8[4096]{0}', space=vmem, size = 0x1000, scoped, tag = 'output window, operand 0, single buffered']
    #allocation3 [shape = 's32[1]{0}', space=sflag, size = 0x4, scoped, tag = 'scoped memory for sac_actor_forward.1']
    %12 = vsyncpa [#allocation3], 0
    // Predicated region
    $region2: #{sac_actor_forward.1} parent=1 // pred_check
      _
    $region3: #{sac_actor_forward.1} parent=1 // pred_check_branch
      %14 = sbr.rel (0) target = $region5
    $region4: #{sac_actor_forward.1} parent=1 // pred_region
      _
    $region5: #{sac_actor_forward.1} parent=1 // pred_fallthru
      _
    // Predicated region
    $region6: #{sac_actor_forward.1} parent=1 // pred_check
      _
    $region7: #{sac_actor_forward.1} parent=1 // pred_check_branch
      %16 = sbr.rel (0) target = $region9
    $region8: #{sac_actor_forward.1} parent=1 // pred_region
      _
    $region9: #{sac_actor_forward.1} parent=1 // pred_fallthru
      _
    // Predicated region
    $region10: #{sac_actor_forward.1} parent=1 // pred_check
      _
    $region11: #{sac_actor_forward.1} parent=1 // pred_check_branch
      %18 = sbr.rel (0) target = $region13
    $region12: #{sac_actor_forward.1} parent=1 // pred_region
      _
    $region13: #{sac_actor_forward.1} parent=1 // pred_fallthru
      _
    // Predicated region
    $region14: #{sac_actor_forward.1} parent=1 // pred_check
      _
    $region15: #{sac_actor_forward.1} parent=1 // pred_check_branch
      %20 = sbr.rel (0) target = $region17
    $region16: #{sac_actor_forward.1} parent=1 // pred_region
      _
    $region17: #{sac_actor_forward.1} parent=1 // pred_fallthru
      _
    // Predicated region
    $region18: #{sac_actor_forward.1} parent=1 // pred_check
      _
    $region19: #{sac_actor_forward.1} parent=1 // pred_check_branch
      %22 = sbr.rel (0) target = $region21
    $region20: #{sac_actor_forward.1} parent=1 // pred_region
      _
    $region21: #{sac_actor_forward.1} parent=1 // pred_fallthru
      _
    // Predicated region
    $region22: #{sac_actor_forward.1} parent=1 // pred_check
      _
    $region23: #{sac_actor_forward.1} parent=1 // pred_check_branch
      %24 = sbr.rel (0) target = $region25
    $region24: #{sac_actor_forward.1} parent=1 // pred_region
      _
    $region25: #{sac_actor_forward.1} parent=1 // pred_fallthru
      _
    // Predicated region
    $region26: #{sac_actor_forward.1} parent=1 // pred_check
      _
    $region27: #{sac_actor_forward.1} parent=1 // pred_check_branch
      %26 = sbr.rel (0) target = $region29
    $region28: #{sac_actor_forward.1} parent=1 // pred_region
      _
    $region29: #{sac_actor_forward.1} parent=1 // pred_fallthru
      _
    %v27 = vld [vmem:[%s0] sm:$0xff]
    %v28 = vld [vmem:[%s1] sm:$0xff]
    %v29 = vld [vmem:[%s1 + $0x8] sm:$0xff]
    %v30 = vld [vmem:[%s1 + $0x10] sm:$0xff]
    %v31 = vld [vmem:[%s1 + $0x18] sm:$0xff]
    %v32 = vld [vmem:[%s1 + $0x20] sm:$0xff]
    %v33 = vld [vmem:[%s1 + $0x28] sm:$0xff]
    %v34 = vld [vmem:[%s1 + $0x30] sm:$0xff]
    %v35 = vld [vmem:[%s1 + $0x38] sm:$0xff]
    %v36 = vld [vmem:[%s1 + $0x40] sm:$0xff]
    %v37 = vld [vmem:[%s1 + $0x48] sm:$0xff]
    %v38 = vld [vmem:[%s1 + $0x50] sm:$0xff]
    %v39 = vld [vmem:[%s1 + $0x58] sm:$0xff]
    %v40 = vld [vmem:[%s1 + $0x60] sm:$0xff]
    %v41 = vld [vmem:[%s1 + $0x68] sm:$0xff]
    %v42 = vld [vmem:[%s1 + $0x70] sm:$0xff]
    %v43 = vld [vmem:[%s1 + $0x78] sm:$0xff]
    %v44 = vld [vmem:[%s1 + $0x80] sm:$0xff]
    %v45 = vld [vmem:[%s1 + $0x88] sm:$0xff]
    %v46 = vld [vmem:[%s1 + $0x90] sm:$0xff]
    %v47 = vld [vmem:[%s1 + $0x98] sm:$0xff]
    %v48 = vld [vmem:[%s1 + $0xa0] sm:$0xff]
    %v49 = vld [vmem:[%s1 + $0xa8] sm:$0xff]
    %v50 = vld [vmem:[%s1 + $0xb0] sm:$0xff]
    %v51 = vld [vmem:[%s1 + $0xb8] sm:$0xff]
    %v52 = vld [vmem:[%s1 + $0xc0] sm:$0xff]
    %v53 = vld [vmem:[%s1 + $0xc8] sm:$0xff]
    %v54 = vld [vmem:[%s1 + $0xd0] sm:$0xff]
    %v55 = vld [vmem:[%s1 + $0xd8] sm:$0xff]
    %v56 = vld [vmem:[%s1 + $0xe0] sm:$0xff]
    %v57 = vld [vmem:[%s1 + $0xe8] sm:$0xff]
    %v58 = vld [vmem:[%s1 + $0xf0] sm:$0xff]
    %v59 = vld [vmem:[%s1 + $0xf8] sm:$0xff]
    %v60 = vld [vmem:[%s2] sm:$0x3]
    %v62 = vlaneseq
    %v63 = vshrl.u32 %v62, 7
    %v64 = vsub.s32 0, %v63
    %v65 = vrot.slane %v60, %v64
    %v66 = vlaneseq
    %v67 = vshrl.u32 %v66, 7
    %v68 = vsub.s32 1, %v67
    %v69 = vrot.slane %v60, %v68
    %72 = vmatprep.subr.mxu0 %v59
    %73 = vmatpush1.msra.mxu0 %v58
    %74 = vmatprep.subr.mxu0 %v57
    %75 = vmatpush1.msra.mxu0 %v56
    %76 = vmatprep.subr.mxu0 %v55
    %77 = vmatpush1.msra.mxu0 %v54
    %78 = vmatprep.subr.mxu0 %v53
    %79 = vmatpush1.msra.mxu0 %v52
    %80 = vmatprep.subr.mxu0 %v51
    %81 = vmatpush1.msra.mxu0 %v50
    %82 = vmatprep.subr.mxu0 %v49
    %83 = vmatpush1.msra.mxu0 %v48
    %84 = vmatprep.subr.mxu0 %v47
    %85 = vmatpush1.msra.mxu0 %v46
    %86 = vmatprep.subr.mxu0 %v45
    %87 = vmatpush1.msra.mxu0 %v44
    %88 = vmatprep.subr.mxu0 %v43
    %89 = vmatpush1.msra.mxu0 %v42
    %90 = vmatprep.subr.mxu0 %v41
    %91 = vmatpush1.msra.mxu0 %v40
    %92 = vmatprep.subr.mxu0 %v39
    %93 = vmatpush1.msra.mxu0 %v38
    %94 = vmatprep.subr.mxu0 %v37
    %95 = vmatpush1.msra.mxu0 %v36
    %96 = vmatprep.subr.mxu0 %v35
    %97 = vmatpush1.msra.mxu0 %v34
    %98 = vmatprep.subr.mxu0 %v33
    %99 = vmatpush1.msra.mxu0 %v32
    %100 = vmatprep.subr.mxu0 %v31
    %101 = vmatpush1.msra.mxu0 %v30
    %102 = vmatprep.subr.mxu0 %v29
    %103 = vmatpush1.msra.mxu0 %v28
    %104 = vmatprep.subr.mxu0 0.0
    %105 = vmatpush2.msra.mxu0 0.0
    %106 = vmatprep.subr.mxu0 0.0
    %107 = vmatpush2.msra.mxu0 0.0
    %108 = vmatprep.subr.mxu0 0.0
    %109 = vmatpush2.msra.mxu0 0.0
    %110 = vmatprep.subr.mxu0 0.0
    %111 = vmatpush2.msra.mxu0 0.0
    %112 = vmatprep.subr.mxu0 0.0
    %113 = vmatpush2.msra.mxu0 0.0
    %114 = vmatprep.subr.mxu0 0.0
    %115 = vmatpush2.msra.mxu0 0.0
    %116 = vmatprep.subr.mxu0 0.0
    %117 = vmatpush2.msra.mxu0 0.0
    %118 = vmatprep.subr.mxu0 0.0
    %119 = vmatpush2.msra.mxu0 0.0
    %120 = vmatprep.subr.mxu0 0.0
    %121 = vmatpush2.msra.mxu0 0.0
    %122 = vmatprep.subr.mxu0 0.0
    %123 = vmatpush2.msra.mxu0 0.0
    %124 = vmatprep.subr.mxu0 0.0
    %125 = vmatpush2.msra.mxu0 0.0
    %126 = vmatprep.subr.mxu0 0.0
    %127 = vmatpush2.msra.mxu0 0.0
    %128 = vmatprep.subr.mxu0 0.0
    %129 = vmatpush2.msra.mxu0 0.0
    %130 = vmatprep.subr.mxu0 0.0
    %131 = vmatpush2.msra.mxu0 0.0
    %132 = vmatprep.subr.mxu0 0.0
    %133 = vmatpush2.msra.mxu0 0.0
    %134 = vmatprep.subr.mxu0 0.0
    %135 = vmatpush2.msra.mxu0 0.0
    %136 = vmatprep.mubr.f32.mxu0 0.0
    %137 = vmatmul.mubr.f32.gmra.mxu0 %v27
    %v138 = vpop.f32.mrf.mxu0
    %v139 = vadd.f32 %v65, %v138
    %v140 = vpop.f32.mrf.mxu0
    %v141 = vadd.f32 %v69, %v140
    %142 = vdwg.mxu0
    %v143 = vmax.f32 %v139, 0.0
    %v144 = vmax.f32 %v141, 0.0
    %v145 = vld [vmem:[%s3] sm:$0xff]
    %v146 = vld [vmem:[%s3 + $0x8] sm:$0xff]
    %v147 = vld [vmem:[%s3 + $0x10] sm:$0xff]
    %v148 = vld [vmem:[%s3 + $0x18] sm:$0xff]
    %v149 = vld [vmem:[%s3 + $0x20] sm:$0xff]
    %v150 = vld [vmem:[%s3 + $0x28] sm:$0xff]
    %v151 = vld [vmem:[%s3 + $0x30] sm:$0xff]
    %v152 = vld [vmem:[%s3 + $0x38] sm:$0xff]
    %v153 = vld [vmem:[%s3 + $0x40] sm:$0xff]
    %v154 = vld [vmem:[%s3 + $0x48] sm:$0xff]
    %v155 = vld [vmem:[%s3 + $0x50] sm:$0xff]
    %v156 = vld [vmem:[%s3 + $0x58] sm:$0xff]
    %v157 = vld [vmem:[%s3 + $0x60] sm:$0xff]
    %v158 = vld [vmem:[%s3 + $0x68] sm:$0xff]
    %v159 = vld [vmem:[%s3 + $0x70] sm:$0xff]
    %v160 = vld [vmem:[%s3 + $0x78] sm:$0xff]
    %v161 = vld [vmem:[%s3 + $0x80] sm:$0xff]
    %v162 = vld [vmem:[%s3 + $0x88] sm:$0xff]
    %v163 = vld [vmem:[%s3 + $0x90] sm:$0xff]
    %v164 = vld [vmem:[%s3 + $0x98] sm:$0xff]
    %v165 = vld [vmem:[%s3 + $0xa0] sm:$0xff]
    %v166 = vld [vmem:[%s3 + $0xa8] sm:$0xff]
    %v167 = vld [vmem:[%s3 + $0xb0] sm:$0xff]
    %v168 = vld [vmem:[%s3 + $0xb8] sm:$0xff]
    %v169 = vld [vmem:[%s3 + $0xc0] sm:$0xff]
    %v170 = vld [vmem:[%s3 + $0xc8] sm:$0xff]
    %v171 = vld [vmem:[%s3 + $0xd0] sm:$0xff]
    %v172 = vld [vmem:[%s3 + $0xd8] sm:$0xff]
    %v173 = vld [vmem:[%s3 + $0xe0] sm:$0xff]
    %v174 = vld [vmem:[%s3 + $0xe8] sm:$0xff]
    %v175 = vld [vmem:[%s3 + $0xf0] sm:$0xff]
    %v176 = vld [vmem:[%s3 + $0xf8] sm:$0xff]
    %v177 = vld [vmem:[%s3 + $0x100] sm:$0xff]
    %v178 = vld [vmem:[%s3 + $0x108] sm:$0xff]
    %v179 = vld [vmem:[%s3 + $0x110] sm:$0xff]
    %v180 = vld [vmem:[%s3 + $0x118] sm:$0xff]
    %v181 = vld [vmem:[%s3 + $0x120] sm:$0xff]
    %v182 = vld [vmem:[%s3 + $0x128] sm:$0xff]
    %v183 = vld [vmem:[%s3 + $0x130] sm:$0xff]
    %v184 = vld [vmem:[%s3 + $0x138] sm:$0xff]
    %v185 = vld [vmem:[%s3 + $0x140] sm:$0xff]
    %v186 = vld [vmem:[%s3 + $0x148] sm:$0xff]
    %v187 = vld [vmem:[%s3 + $0x150] sm:$0xff]
    %v188 = vld [vmem:[%s3 + $0x158] sm:$0xff]
    %v189 = vld [vmem:[%s3 + $0x160] sm:$0xff]
    %v190 = vld [vmem:[%s3 + $0x168] sm:$0xff]
    %v191 = vld [vmem:[%s3 + $0x170] sm:$0xff]
    %v192 = vld [vmem:[%s3 + $0x178] sm:$0xff]
    %v193 = vld [vmem:[%s3 + $0x180] sm:$0xff]
    %v194 = vld [vmem:[%s3 + $0x188] sm:$0xff]
    %v195 = vld [vmem:[%s3 + $0x190] sm:$0xff]
    %v196 = vld [vmem:[%s3 + $0x198] sm:$0xff]
    %v197 = vld [vmem:[%s3 + $0x1a0] sm:$0xff]
    %v198 = vld [vmem:[%s3 + $0x1a8] sm:$0xff]
    %v199 = vld [vmem:[%s3 + $0x1b0] sm:$0xff]
    %v200 = vld [vmem:[%s3 + $0x1b8] sm:$0xff]
    %v201 = vld [vmem:[%s3 + $0x1c0] sm:$0xff]
    %v202 = vld [vmem:[%s3 + $0x1c8] sm:$0xff]
    %v203 = vld [vmem:[%s3 + $0x1d0] sm:$0xff]
    %v204 = vld [vmem:[%s3 + $0x1d8] sm:$0xff]
    %v205 = vld [vmem:[%s3 + $0x1e0] sm:$0xff]
    %v206 = vld [vmem:[%s3 + $0x1e8] sm:$0xff]
    %v207 = vld [vmem:[%s3 + $0x1f0] sm:$0xff]
    %v208 = vld [vmem:[%s3 + $0x1f8] sm:$0xff]
    %v209 = vld [vmem:[%s4] sm:$0x3]
    %v211 = vlaneseq
    %v212 = vshrl.u32 %v211, 7
    %v213 = vsub.s32 0, %v212
    %v214 = vrot.slane %v209, %v213
    %v215 = vlaneseq
    %v216 = vshrl.u32 %v215, 7
    %v217 = vsub.s32 1, %v216
    %v218 = vrot.slane %v209, %v217
    %221 = vmatprep.subr.mxu0 %v176
    %222 = vmatpush1.msra.mxu0 %v175
    %223 = vmatprep.subr.mxu0 %v174
    %224 = vmatpush1.msra.mxu0 %v173
    %225 = vmatprep.subr.mxu0 %v172
    %226 = vmatpush1.msra.mxu0 %v171
    %227 = vmatprep.subr.mxu0 %v170
    %228 = vmatpush1.msra.mxu0 %v169
    %229 = vmatprep.subr.mxu0 %v168
    %230 = vmatpush1.msra.mxu0 %v167
    %231 = vmatprep.subr.mxu0 %v166
    %232 = vmatpush1.msra.mxu0 %v165
    %233 = vmatprep.subr.mxu0 %v164
    %234 = vmatpush1.msra.mxu0 %v163
    %235 = vmatprep.subr.mxu0 %v162
    %236 = vmatpush1.msra.mxu0 %v161
    %237 = vmatprep.subr.mxu0 %v160
    %238 = vmatpush1.msra.mxu0 %v159
    %239 = vmatprep.subr.mxu0 %v158
    %240 = vmatpush1.msra.mxu0 %v157
    %241 = vmatprep.subr.mxu0 %v156
    %242 = vmatpush1.msra.mxu0 %v155
    %243 = vmatprep.subr.mxu0 %v154
    %244 = vmatpush1.msra.mxu0 %v153
    %245 = vmatprep.subr.mxu0 %v152
    %246 = vmatpush1.msra.mxu0 %v151
    %247 = vmatprep.subr.mxu0 %v150
    %248 = vmatpush1.msra.mxu0 %v149
    %249 = vmatprep.subr.mxu0 %v148
    %250 = vmatpush1.msra.mxu0 %v147
    %251 = vmatprep.subr.mxu0 %v146
    %252 = vmatpush1.msra.mxu0 %v145
    %253 = vmatprep.subr.mxu0 %v208
    %254 = vmatpush2.msra.mxu0 %v207
    %255 = vmatprep.subr.mxu0 %v206
    %256 = vmatpush2.msra.mxu0 %v205
    %257 = vmatprep.subr.mxu0 %v204
    %258 = vmatpush2.msra.mxu0 %v203
    %259 = vmatprep.subr.mxu0 %v202
    %260 = vmatpush2.msra.mxu0 %v201
    %261 = vmatprep.subr.mxu0 %v200
    %262 = vmatpush2.msra.mxu0 %v199
    %263 = vmatprep.subr.mxu0 %v198
    %264 = vmatpush2.msra.mxu0 %v197
    %265 = vmatprep.subr.mxu0 %v196
    %266 = vmatpush2.msra.mxu0 %v195
    %267 = vmatprep.subr.mxu0 %v194
    %268 = vmatpush2.msra.mxu0 %v193
    %269 = vmatprep.subr.mxu0 %v192
    %270 = vmatpush2.msra.mxu0 %v191
    %271 = vmatprep.subr.mxu0 %v190
    %272 = vmatpush2.msra.mxu0 %v189
    %273 = vmatprep.subr.mxu0 %v188
    %274 = vmatpush2.msra.mxu0 %v187
    %275 = vmatprep.subr.mxu0 %v186
    %276 = vmatpush2.msra.mxu0 %v185
    %277 = vmatprep.subr.mxu0 %v184
    %278 = vmatpush2.msra.mxu0 %v183
    %279 = vmatprep.subr.mxu0 %v182
    %280 = vmatpush2.msra.mxu0 %v181
    %281 = vmatprep.subr.mxu0 %v180
    %282 = vmatpush2.msra.mxu0 %v179
    %283 = vmatprep.subr.mxu0 %v178
    %284 = vmatpush2.msra.mxu0 %v177
    %285 = vmatprep.mubr.f32.mxu0 %v144
    %286 = vmatmul.mubr.f32.gmra.mxu0 %v143
    %v287 = vpop.f32.mrf.mxu0
    %v288 = vadd.f32 %v214, %v287
    %v289 = vpop.f32.mrf.mxu0
    %v290 = vadd.f32 %v218, %v289
    %291 = vdwg.mxu0
    %v292 = vmax.f32 %v288, 0.0
    %v293 = vmax.f32 %v290, 0.0
    %v294 = vld [vmem:[%s5] sm:$0xff]
    %v295 = vld [vmem:[%s5 + $0x8] sm:$0xff]
    %v296 = vld [vmem:[%s5 + $0x10] sm:$0xff]
    %v297 = vld [vmem:[%s5 + $0x18] sm:$0xff]
    %v298 = vld [vmem:[%s5 + $0x20] sm:$0xff]
    %v299 = vld [vmem:[%s5 + $0x28] sm:$0xff]
    %v300 = vld [vmem:[%s5 + $0x30] sm:$0xff]
    %v301 = vld [vmem:[%s5 + $0x38] sm:$0xff]
    %v302 = vld [vmem:[%s5 + $0x40] sm:$0xff]
    %v303 = vld [vmem:[%s5 + $0x48] sm:$0xff]
    %v304 = vld [vmem:[%s5 + $0x50] sm:$0xff]
    %v305 = vld [vmem:[%s5 + $0x58] sm:$0xff]
    %v306 = vld [vmem:[%s5 + $0x60] sm:$0xff]
    %v307 = vld [vmem:[%s5 + $0x68] sm:$0xff]
    %v308 = vld [vmem:[%s5 + $0x70] sm:$0xff]
    %v309 = vld [vmem:[%s5 + $0x78] sm:$0xff]
    %v310 = vld [vmem:[%s5 + $0x80] sm:$0xff]
    %v311 = vld [vmem:[%s5 + $0x88] sm:$0xff]
    %v312 = vld [vmem:[%s5 + $0x90] sm:$0xff]
    %v313 = vld [vmem:[%s5 + $0x98] sm:$0xff]
    %v314 = vld [vmem:[%s5 + $0xa0] sm:$0xff]
    %v315 = vld [vmem:[%s5 + $0xa8] sm:$0xff]
    %v316 = vld [vmem:[%s5 + $0xb0] sm:$0xff]
    %v317 = vld [vmem:[%s5 + $0xb8] sm:$0xff]
    %v318 = vld [vmem:[%s5 + $0xc0] sm:$0xff]
    %v319 = vld [vmem:[%s5 + $0xc8] sm:$0xff]
    %v320 = vld [vmem:[%s5 + $0xd0] sm:$0xff]
    %v321 = vld [vmem:[%s5 + $0xd8] sm:$0xff]
    %v322 = vld [vmem:[%s5 + $0xe0] sm:$0xff]
    %v323 = vld [vmem:[%s5 + $0xe8] sm:$0xff]
    %v324 = vld [vmem:[%s5 + $0xf0] sm:$0xff]
    %v325 = vld [vmem:[%s5 + $0xf8] sm:$0xff]
    %v326 = vld [vmem:[%s6] sm:$0x1]
    %v328 = vlaneseq
    %v329 = vshrl.u32 %v328, 7
    %v330 = vsub.s32 0, %v329
    %v331 = vrot.slane %v326, %v330
    %333 = vmatprep.subr.mxu0 0.0
    %334 = vmatpush1.msra.mxu0 %v309
    %335 = vmatprep.subr.mxu0 0.0
    %336 = vmatpush1.msra.mxu0 %v308
    %337 = vmatprep.subr.mxu0 0.0
    %338 = vmatpush1.msra.mxu0 %v307
    %339 = vmatprep.subr.mxu0 0.0
    %340 = vmatpush1.msra.mxu0 %v306
    %341 = vmatprep.subr.mxu0 0.0
    %342 = vmatpush1.msra.mxu0 %v305
    %343 = vmatprep.subr.mxu0 0.0
    %344 = vmatpush1.msra.mxu0 %v304
    %345 = vmatprep.subr.mxu0 0.0
    %346 = vmatpush1.msra.mxu0 %v303
    %347 = vmatprep.subr.mxu0 0.0
    %348 = vmatpush1.msra.mxu0 %v302
    %349 = vmatprep.subr.mxu0 0.0
    %350 = vmatpush1.msra.mxu0 %v301
    %351 = vmatprep.subr.mxu0 0.0
    %352 = vmatpush1.msra.mxu0 %v300
    %353 = vmatprep.subr.mxu0 0.0
    %354 = vmatpush1.msra.mxu0 %v299
    %355 = vmatprep.subr.mxu0 0.0
    %356 = vmatpush1.msra.mxu0 %v298
    %357 = vmatprep.subr.mxu0 0.0
    %358 = vmatpush1.msra.mxu0 %v297
    %359 = vmatprep.subr.mxu0 0.0
    %360 = vmatpush1.msra.mxu0 %v296
    %361 = vmatprep.subr.mxu0 0.0
    %362 = vmatpush1.msra.mxu0 %v295
    %363 = vmatprep.subr.mxu0 0.0
    %364 = vmatpush1.msra.mxu0 %v294
    %365 = vmatprep.subr.mxu0 0.0
    %366 = vmatpush2.msra.mxu0 %v325
    %367 = vmatprep.subr.mxu0 0.0
    %368 = vmatpush2.msra.mxu0 %v324
    %369 = vmatprep.subr.mxu0 0.0
    %370 = vmatpush2.msra.mxu0 %v323
    %371 = vmatprep.subr.mxu0 0.0
    %372 = vmatpush2.msra.mxu0 %v322
    %373 = vmatprep.subr.mxu0 0.0
    %374 = vmatpush2.msra.mxu0 %v321
    %375 = vmatprep.subr.mxu0 0.0
    %376 = vmatpush2.msra.mxu0 %v320
    %377 = vmatprep.subr.mxu0 0.0
    %378 = vmatpush2.msra.mxu0 %v319
    %379 = vmatprep.subr.mxu0 0.0
    %380 = vmatpush2.msra.mxu0 %v318
    %381 = vmatprep.subr.mxu0 0.0
    %382 = vmatpush2.msra.mxu0 %v317
    %383 = vmatprep.subr.mxu0 0.0
    %384 = vmatpush2.msra.mxu0 %v316
    %385 = vmatprep.subr.mxu0 0.0
    %386 = vmatpush2.msra.mxu0 %v315
    %387 = vmatprep.subr.mxu0 0.0
    %388 = vmatpush2.msra.mxu0 %v314
    %389 = vmatprep.subr.mxu0 0.0
    %390 = vmatpush2.msra.mxu0 %v313
    %391 = vmatprep.subr.mxu0 0.0
    %392 = vmatpush2.msra.mxu0 %v312
    %393 = vmatprep.subr.mxu0 0.0
    %394 = vmatpush2.msra.mxu0 %v311
    %395 = vmatprep.subr.mxu0 0.0
    %396 = vmatpush2.msra.mxu0 %v310
    %397 = vmatprep.mubr.f32.mxu0 %v293
    %398 = vmatmul.mubr.f32.gmra.mxu0 %v292
    %v399 = vpop.f32.mrf.mxu0
    %v400 = vadd.f32 %v331, %v399
    %v401 = vpop.f32.mrf.mxu0
    %402 = vdwg.mxu0
    %403 = vst [vmem:[#allocation2] sm:$0xff] %v400
    // Predicated region
    $region30: #{sac_actor_forward.1} parent=1 // pred_check
      _
    $region31: #{sac_actor_forward.1} parent=1 // pred_check_branch
      %405 = sbr.rel (0) target = $region33
    $region32: #{sac_actor_forward.1} parent=1 // pred_region
      %s407 = ssub.s32 128, 128
      %408 = vsyncadd [#allocation3], %s407
      %s410 = sshll.u32 [#allocation2], 4
      %s411 = int_to_ptr.vmem [resolvable:$true] %s410
      %413 = dma.vmem_to_hbm [thread:$0]  %s411, 128, %s7, [#allocation3]
    $region33: #{sac_actor_forward.1} parent=1 // pred_fallthru
      _
    // Predicated region
    $region34: #{sac_actor_forward.1} parent=1 // pred_check
      _
    $region35: #{sac_actor_forward.1} parent=1 // pred_check_branch
      %415 = sbr.rel (0) target = $region37
    $region36: #{sac_actor_forward.1} parent=1 // pred_region
      %416 = dma.done [#allocation3], 128
    $region37: #{sac_actor_forward.1} parent=1 // pred_fallthru
      _
    %417 = vsyncpa [#allocation3], 1

</llo_original>
